<compile_context>
chip_gen: v5e
topology: v5e:2x2
jax: 0.10.0
libtpu: 0.0.40
codegen_flags: <defaults>
</compile_context>

<pallas_src>
import math
import functools

import jax
import jax.numpy as jnp
from jax.experimental import pallas as pl
from jax.experimental.pallas import tpu as pltpu


def make_pos_embedding(emb_size: int, maxlen: int = 5000) -> jnp.ndarray:
    """Deterministic buffer, identical math to the PyTorch __init__."""
    den = jnp.exp(-jnp.arange(0, emb_size, 2, dtype=jnp.float32)
                  * math.log(10000.0) / emb_size)
    pos = jnp.arange(0, maxlen, dtype=jnp.float32).reshape(maxlen, 1)
    pe = jnp.zeros((maxlen, emb_size), dtype=jnp.float32)
    pe = pe.at[:, 0::2].set(jnp.sin(pos * den))
    pe = pe.at[:, 1::2].set(jnp.cos(pos * den))
    return pe[:, None, :]  # (maxlen, 1, emb_size)


# ---------------------------------------------------------------------------
# Kernels
# ---------------------------------------------------------------------------

def _pe_add_kernel(x_ref, pe_ref, o_ref):
    # x_ref:  (tile_s, B, E)  token-embedding tile
    # pe_ref: (tile_s, 1, E)  positional-encoding tile (broadcast over batch)
    y = x_ref[...].astype(jnp.float32) + pe_ref[...]
    o_ref[...] = y.astype(o_ref.dtype)


def _pe_add_dropout_kernel(x_ref, pe_ref, rand_ref, o_ref, *,
                           keep_threshold: int, inv_keep: float):
    # rand_ref: (tile_s, B, E) int32 uniform in [0, 2**24); keep iff < threshold.
    y = x_ref[...].astype(jnp.float32) + pe_ref[...]
    keep = rand_ref[...] < jnp.int32(keep_threshold)
    o_ref[...] = jnp.where(keep, y * inv_keep, 0.0).astype(o_ref.dtype)


# ---------------------------------------------------------------------------
# Wrapper (forward pass)
# ---------------------------------------------------------------------------

def positional_encoding_forward(token_embedding: jnp.ndarray,
                                pos_embedding: jnp.ndarray,
                                dropout_p: float,
                                rng_key=None,
                                training: bool = True) -> jnp.ndarray:
    """Equivalent of PositionalEncoding.forward.

    token_embedding: (S, B, E)
    pos_embedding:   (maxlen, 1, E) float32 buffer (maxlen >= S)
    """
    S, B, E = token_embedding.shape
    pe_slice = pos_embedding[:S].astype(jnp.float32)  # pos_embedding[:x.size(0), :]

    apply_dropout = training and dropout_p > 0.0
    keep_prob = 1.0 - float(dropout_p)

    # --- Tiling along the sequence axis ------------------------------------
    # Aim for ~2 MiB per token-embedding tile: big enough to sit near the HBM
    # roofline for this mem-bound op, small enough that double-buffered
    # inputs + output + random bits comfortably fit scoped VMEM on
    # v5e (16 MiB default) / v6e (32 MiB) / v7x (64 MiB physical).
    itemsize = jnp.dtype(token_embedding.dtype).itemsize
    bytes_per_s_row = max(1, B * E * itemsize)
    target_tile_bytes = 2 * 1024 * 1024
    tile_s = max(1, min(S, target_tile_bytes // bytes_per_s_row))
    if tile_s >= 8:
        tile_s -= tile_s % 8  # keep sequence tiles nicely aligned
    grid = (pl.cdiv(S, tile_s),)  # ragged tail handled by Pallas block padding

    x_spec = pl.BlockSpec((tile_s, B, E), lambda i: (i, 0, 0))
    pe_spec = pl.BlockSpec((tile_s, 1, E), lambda i: (i, 0, 0))
    out_spec = pl.BlockSpec((tile_s, B, E), lambda i: (i, 0, 0))

    compiler_params = pltpu.CompilerParams(
        # Tiles are fully independent -> shard across both TCs on v7x;
        # neutral on single-TC v5e/v6e.
        dimension_semantics=("parallel",),
        vmem_limit_bytes=32 * 1024 * 1024,
    )

    if not apply_dropout:
        return pl.pallas_call(
            _pe_add_kernel,
            out_shape=jax.ShapeDtypeStruct((S, B, E), token_embedding.dtype),
            grid_spec=pltpu.PrefetchScalarGridSpec(
                num_scalar_prefetch=0,
                grid=grid,
                in_specs=[x_spec, pe_spec],
                out_specs=out_spec),
            compiler_params=compiler_params,
        )(token_embedding, pe_slice)

    # --- Training-mode dropout ---------------------------------------------
    # TODO(synk): the on-chip PRNG (pltpu.prng_random_bits) would avoid this
    # extra HBM read, but it has no CPU/interpret lowering, so the random
    # stream is generated host-side with jax.random instead.
    if rng_key is None:
        rng_key = jax.random.PRNGKey(0)
    rand24 = jax.random.randint(rng_key, (S, B, E),
                                minval=0, maxval=1 << 24, dtype=jnp.int32)
    keep_threshold = int(round(keep_prob * (1 << 24)))  # P(keep) = keep_prob

    kernel = functools.partial(_pe_add_dropout_kernel,
                               keep_threshold=keep_threshold,
                               inv_keep=1.0 / keep_prob)

    return pl.pallas_call(
        kernel,
        out_shape=jax.ShapeDtypeStruct((S, B, E), token_embedding.dtype),
        grid_spec=pltpu.PrefetchScalarGridSpec(
            num_scalar_prefetch=0,
            grid=grid,
            in_specs=[x_spec, pe_spec, x_spec],
            out_specs=out_spec),
        compiler_params=compiler_params,
    )(token_embedding, pe_slice, rand24)


# ---------------------------------------------------------------------------
# Demo / self-check
# ---------------------------------------------------------------------------

if __name__ == "__main__":
    # Small shapes consistent with the module: seq=8, batch=2, emb_size=32.
    EMB_SIZE = 32
    MAXLEN = 64
    DROPOUT_P = 0.1
    S, B = 8, 2

    key = jax.random.PRNGKey(0)
    data_key, drop_key = jax.random.split(key)
    token_embedding = jax.random.normal(data_key, (S, B, EMB_SIZE),
                                        dtype=jnp.float32)
    pos_embedding = make_pos_embedding(EMB_SIZE, MAXLEN)

    # Eval mode: pure add, must match the reference exactly.
    eval_out = positional_encoding_forward(
        token_embedding, pos_embedding, DROPOUT_P, training=False)
    eval_out = jax.block_until_ready(eval_out)
    ref = token_embedding + pos_embedding[:S]
    assert eval_out.shape == (S, B, EMB_SIZE)
    assert jnp.allclose(eval_out, ref, atol=1e-6)

    # Training mode: inverted dropout on (x + pe).
    train_out = positional_encoding_forward(
        token_embedding, pos_embedding, DROPOUT_P,
        rng_key=drop_key, training=True)
    train_out = jax.block_until_ready(train_out)
    assert train_out.shape == (S, B, EMB_SIZE)
    assert train_out.dtype == jnp.float32
    kept = train_out != 0.0
    expected = jnp.where(kept, ref / (1.0 - DROPOUT_P), 0.0)
    assert jnp.allclose(train_out, expected, atol=1e-5)

    print("KERNEL_OK")
</pallas_src>

<mosaic_0001>
module attributes {stable_mosaic.version = 11 : i64} {
  func.func @_pe_add_kernel(%arg0: i32, %arg1: memref<8x2x32xf32, #tpu.memory_space<vmem>>, %arg2: memref<8x1x32xf32, #tpu.memory_space<vmem>>, %arg3: memref<8x2x32xf32, #tpu.memory_space<vmem>>) attributes {dimension_semantics = [#tpu.dimension_semantics<parallel>], iteration_bounds = array<i64: 1>, scalar_prefetch = 0 : i64, scratch_operands = 0 : i64, tpu.core_type = #tpu.core_type<tc>, window_params = [{transform_indices = @transform_0, window_bounds = array<i64: 8, 2, 32>}, {transform_indices = @transform_1, window_bounds = array<i64: 8, 1, 32>}, {transform_indices = @transform_2, window_bounds = array<i64: 8, 2, 32>}]} {
    %c0 = arith.constant 0 : index
    %c0_0 = arith.constant 0 : index
    %c0_1 = arith.constant 0 : index
    %0 = vector.load %arg1[%c0, %c0_0, %c0_1] : memref<8x2x32xf32, #tpu.memory_space<vmem>>, vector<8x2x32xf32>
    %c0_2 = arith.constant 0 : index
    %c0_3 = arith.constant 0 : index
    %c0_4 = arith.constant 0 : index
    %1 = vector.load %arg2[%c0_2, %c0_3, %c0_4] : memref<8x1x32xf32, #tpu.memory_space<vmem>>, vector<8x1x32xf32>
    %2 = vector.broadcast %1 : vector<8x1x32xf32> to vector<8x2x32xf32>
    %3 = arith.addf %0, %2 : vector<8x2x32xf32>
    %c0_5 = arith.constant 0 : index
    %c0_6 = arith.constant 0 : index
    %c0_7 = arith.constant 0 : index
    %4 = vector.load %arg3[%c0_5, %c0_6, %c0_7] : memref<8x2x32xf32, #tpu.memory_space<vmem>>, vector<8x2x32xf32>
    tpu.vector_store %arg3[%c0_5, %c0_6, %c0_7], %3 {strides = array<i32>} : memref<8x2x32xf32, #tpu.memory_space<vmem>>, vector<8x2x32xf32>,
    return
  }
  func.func @transform_0(%arg0: i32) -> (i32, i32, i32) {
    %c0_i32 = arith.constant 0 : i32
    %c0_i32_0 = arith.constant 0 : i32
    %c0_i32_1 = arith.constant 0 : i32
    return %arg0, %c0_i32, %c0_i32_0 : i32, i32, i32
  }
  func.func @transform_1(%arg0: i32) -> (i32, i32, i32) {
    %c0_i32 = arith.constant 0 : i32
    %c0_i32_0 = arith.constant 0 : i32
    %c0_i32_1 = arith.constant 0 : i32
    return %arg0, %c0_i32, %c0_i32_0 : i32, i32, i32
  }
  func.func @transform_2(%arg0: i32) -> (i32, i32, i32) {
    %c0_i32 = arith.constant 0 : i32
    %c0_i32_0 = arith.constant 0 : i32
    %c0_i32_1 = arith.constant 0 : i32
    return %arg0, %c0_i32, %c0_i32_0 : i32, i32, i32
  }
}

</mosaic_0001>

<llo_original>
// kernel: tpu_custom_call.1
$region0: #{tpu_custom_call.1}
  #allocation0 [shape = 'u32[]', space=smem, size = 0x4, offset = 0x4, fixed_abs, tag = 'smem constant byte address 0x4 - core index']
  #allocation1 [shape = 'u32[72,128]{1,0:T(1,128)}', space=vmem, size = 0x9000, scoped, tag = 'internal scratch']
  %s0 = inlined_call_operand.hbm [shape: f32[8,2,32], index: 0, kind: input, shape index: {}]
  %s1 = inlined_call_operand.hbm [shape: f32[8,1,32], index: 1, kind: input, shape index: {}]
  %s2 = inlined_call_operand.hbm [shape: f32[8,2,32], index: 2, kind: output, shape index: {}]
  %s3 = sld [smem:[#allocation0]]
  $region26: #{tpu_custom_call.1} parent=0
    _
  %s5 = ssub.s32 1, %s3
  %s6 = scalar_select 0, %s5, %s3
  $region1: #{tpu_custom_call.1} parent=0
    #allocation2 [shape = 'u8[8192]{0}', space=vmem, size = 0x2000, scoped, tag = 'input window, operand 0, single buffered']
    #allocation3 [shape = 's32[1]{0}', space=sflag, size = 0x4, scoped, tag = 'scoped memory for tpu_custom_call.1']
    #allocation4 [shape = 's32[1]{0}', space=sflag, size = 0x4, scoped, tag = 'scoped memory for tpu_custom_call.1']
    #allocation5 [shape = 'u8[4096]{0}', space=vmem, size = 0x1000, scoped, tag = 'input window, operand 1, single buffered']
    #allocation6 [shape = 's32[1]{0}', space=sflag, size = 0x4, scoped, tag = 'scoped memory for tpu_custom_call.1']
    #allocation7 [shape = 'u8[8192]{0}', space=vmem, size = 0x2000, scoped, tag = 'output window, operand 0, single buffered']
    %7 = vsyncpa [#allocation3], 0
    %8 = vsyncpa [#allocation6], 0
    %9 = vsyncpa [#allocation4], 0
    // Predicated region
    $region2: #{tpu_custom_call.1} parent=1 // pred_check
      _
    $region3: #{tpu_custom_call.1} parent=1 // pred_check_branch
      %11 = sbr.rel (0) target = $region5
    $region4: #{tpu_custom_call.1} parent=1 // pred_region
      %13 = vsyncadd [#allocation3], 0
      %s14 = sshll.u32 %s0, 4
      %s15 = int_to_ptr.hbm [resolvable:$true] %s14
      %s16 = sshll.u32 [#allocation2], 4
      %s17 = int_to_ptr.vmem [resolvable:$true] %s16
      %22 = dma.hbm_to_vmem [thread:$0]  %s15, 256, %s17, [#allocation3], 32, 32, 2
    $region5: #{tpu_custom_call.1} parent=1 // pred_fallthru
      _
    // Predicated region
    $region6: #{tpu_custom_call.1} parent=1 // pred_check
      _
    $region7: #{tpu_custom_call.1} parent=1 // pred_check_branch
      %24 = sbr.rel (0) target = $region9
    $region8: #{tpu_custom_call.1} parent=1 // pred_region
      %26 = vsyncadd [#allocation6], 0
      %s27 = sshll.u32 %s1, 4
      %s28 = int_to_ptr.hbm [resolvable:$true] %s27
      %s29 = sshll.u32 [#allocation5], 4
      %s30 = int_to_ptr.vmem [resolvable:$true] %s29
      %35 = dma.hbm_to_vmem [thread:$0]  %s28, 128, %s30, [#allocation6], 16, 16, 1
    $region9: #{tpu_custom_call.1} parent=1 // pred_fallthru
      _
    // Predicated region
    $region10: #{tpu_custom_call.1} parent=1 // pred_check
      _
    $region11: #{tpu_custom_call.1} parent=1 // pred_check_branch
      %37 = sbr.rel (0) target = $region13
    $region12: #{tpu_custom_call.1} parent=1 // pred_region
      %39 = dma.done [#allocation3], 256
    $region13: #{tpu_custom_call.1} parent=1 // pred_fallthru
      _
    // Predicated region
    $region14: #{tpu_custom_call.1} parent=1 // pred_check
      _
    $region15: #{tpu_custom_call.1} parent=1 // pred_check_branch
      %41 = sbr.rel (0) target = $region17
    $region16: #{tpu_custom_call.1} parent=1 // pred_region
      %43 = dma.done [#allocation6], 128
    $region17: #{tpu_custom_call.1} parent=1 // pred_fallthru
      _
    %v44 = vld [vmem:[#allocation2] sm:$0x3]
    %v45 = vld [vmem:[#allocation2 + $0x2] sm:$0x3]
    %v46 = vld [vmem:[#allocation2 + $0x4] sm:$0x3]
    %v47 = vld [vmem:[#allocation2 + $0x6] sm:$0x3]
    %v48 = vld [vmem:[#allocation2 + $0x8] sm:$0x3]
    %v49 = vld [vmem:[#allocation2 + $0xa] sm:$0x3]
    %v50 = vld [vmem:[#allocation2 + $0xc] sm:$0x3]
    %v51 = vld [vmem:[#allocation2 + $0xe] sm:$0x3]
    %v52 = vld [vmem:[#allocation5] sm:$0x1]
    %v53 = vld [vmem:[#allocation5 + $0x1] sm:$0x1]
    %v54 = vld [vmem:[#allocation5 + $0x2] sm:$0x1]
    %v55 = vld [vmem:[#allocation5 + $0x3] sm:$0x1]
    %v56 = vld [vmem:[#allocation5 + $0x4] sm:$0x1]
    %v57 = vld [vmem:[#allocation5 + $0x5] sm:$0x1]
    %v58 = vld [vmem:[#allocation5 + $0x6] sm:$0x1]
    %v59 = vld [vmem:[#allocation5 + $0x7] sm:$0x1]
    %v68 = vperm.slane %v52, 0
    %v69 = vperm.slane %v53, 0
    %v70 = vperm.slane %v54, 0
    %v71 = vperm.slane %v55, 0
    %v72 = vperm.slane %v56, 0
    %v73 = vperm.slane %v57, 0
    %v74 = vperm.slane %v58, 0
    %v75 = vperm.slane %v59, 0
    %v84 = vadd.f32 %v44, %v68
    %v85 = vadd.f32 %v45, %v69
    %v86 = vadd.f32 %v46, %v70
    %v87 = vadd.f32 %v47, %v71
    %v88 = vadd.f32 %v48, %v72
    %v89 = vadd.f32 %v49, %v73
    %v90 = vadd.f32 %v50, %v74
    %v91 = vadd.f32 %v51, %v75
    %vm92 = vcmask 254976
    %93 = vst.msk [vmem:[#allocation7] sm:$0x3] %vm92, %v84
    %94 = vst.msk [vmem:[#allocation7 + $0x2] sm:$0x3] %vm92, %v85
    %95 = vst.msk [vmem:[#allocation7 + $0x4] sm:$0x3] %vm92, %v86
    %96 = vst.msk [vmem:[#allocation7 + $0x6] sm:$0x3] %vm92, %v87
    %97 = vst.msk [vmem:[#allocation7 + $0x8] sm:$0x3] %vm92, %v88
    %98 = vst.msk [vmem:[#allocation7 + $0xa] sm:$0x3] %vm92, %v89
    %99 = vst.msk [vmem:[#allocation7 + $0xc] sm:$0x3] %vm92, %v90
    %100 = vst.msk [vmem:[#allocation7 + $0xe] sm:$0x3] %vm92, %v91
    // Predicated region
    $region18: #{tpu_custom_call.1} parent=1 // pred_check
      _
    $region19: #{tpu_custom_call.1} parent=1 // pred_check_branch
      %102 = sbr.rel (0) target = $region21
    $region20: #{tpu_custom_call.1} parent=1 // pred_region
      %104 = vsyncadd [#allocation4], 0
      %s105 = sshll.u32 [#allocation7], 4
      %s106 = int_to_ptr.vmem [resolvable:$true] %s105
      %s107 = sshll.u32 %s2, 4
      %s108 = int_to_ptr.hbm [resolvable:$true] %s107
      %113 = dma.vmem_to_hbm [thread:$0]  %s106, 256, %s108, [#allocation4], 32, 32, 2
    $region21: #{tpu_custom_call.1} parent=1 // pred_fallthru
      _
    // Predicated region
    $region22: #{tpu_custom_call.1} parent=1 // pred_check
      _
    $region23: #{tpu_custom_call.1} parent=1 // pred_check_branch
      %115 = sbr.rel (0) target = $region25
    $region24: #{tpu_custom_call.1} parent=1 // pred_region
      %117 = dma.done [#allocation4], 256
    $region25: #{tpu_custom_call.1} parent=1 // pred_fallthru
      _
    %118 = vsyncpa [#allocation3], 1
    %119 = vsyncpa [#allocation6], 1
    %120 = vsyncpa [#allocation4], 1

</llo_original>
